<compile_context>
chip_gen: v7x
topology: tpu7x:2x2x1
jax: 0.10.0
libtpu: 0.0.40
codegen_flags: <defaults>
</compile_context>

<pallas_src>
import functools
import math

import jax
import jax.numpy as jnp
from jax.experimental import pallas as pl
from jax.experimental.pallas import tpu as pltpu


# -----------------------------------------------------------------------------
# Pallas kernels
# -----------------------------------------------------------------------------
def _gemm_kernel(x_ref, w_ref, o_ref):
    """out = x @ w  (bf16 operands, f32 MXU accumulation, cast on store)."""
    o_ref[...] = jnp.dot(
        x_ref[...], w_ref[...], preferred_element_type=jnp.float32
    ).astype(o_ref.dtype)


def _bn_kernel(x_ref, g_ref, b_ref, o_ref, *, count, relu):
    """Batch-statistic BatchNorm over rows (+ optional ReLU)."""
    x = x_ref[...].astype(jnp.float32)
    inv_n = 1.0 / count
    mean = jnp.sum(x, axis=0, keepdims=True) * inv_n
    xc = x - mean
    var = jnp.sum(xc * xc, axis=0, keepdims=True) * inv_n
    y = xc * jax.lax.rsqrt(var + 1e-5) * g_ref[...] + b_ref[...]
    if relu:
        y = jnp.maximum(y, 0.0)
    o_ref[...] = y.astype(o_ref.dtype)


def _bn_res_kernel(x_ref, res_ref, g_ref, b_ref, o_ref, *, count, relu):
    """BatchNorm over rows + residual add (+ optional ReLU), fused."""
    x = x_ref[...].astype(jnp.float32)
    inv_n = 1.0 / count
    mean = jnp.sum(x, axis=0, keepdims=True) * inv_n
    xc = x - mean
    var = jnp.sum(xc * xc, axis=0, keepdims=True) * inv_n
    y = xc * jax.lax.rsqrt(var + 1e-5) * g_ref[...] + b_ref[...]
    y = y + res_ref[...].astype(jnp.float32)
    if relu:
        y = jnp.maximum(y, 0.0)
    o_ref[...] = y.astype(o_ref.dtype)


# -----------------------------------------------------------------------------
# Pallas wrappers
# -----------------------------------------------------------------------------
def gemm_shared(x2d, w2d, out_dtype=jnp.bfloat16):
    """x2d: (M, K); w2d: (K, N).  Shared-weight GEMM, M-tiled parallel grid."""
    M, K = x2d.shape
    K2, N = w2d.shape
    assert K == K2
    xb = x2d.astype(jnp.bfloat16)
    wb = w2d.astype(jnp.bfloat16)

    # Pick the largest M tile that divides M cleanly; otherwise one full block.
    tm = M
    for cand in (256, 128):
        if M % cand == 0 and M >= 2 * cand:
            tm = cand
            break

    return pl.pallas_call(
        _gemm_kernel,
        out_shape=jax.ShapeDtypeStruct((M, N), out_dtype),
        grid=(M // tm,),
        in_specs=[
            pl.BlockSpec((tm, K), lambda i: (i, 0)),
            pl.BlockSpec((K, N), lambda i: (0, 0)),   # weights resident across tiles
        ],
        out_specs=pl.BlockSpec((tm, N), lambda i: (i, 0)),
        compiler_params=pltpu.CompilerParams(dimension_semantics=("parallel",)),
    )(xb, wb)


def gemm_batched(x, w, out_dtype=jnp.bfloat16):
    """x: (B, M, K); w: (B, K, N) per-sample weights (dynamic convolution)."""
    B, M, K = x.shape
    _, K2, N = w.shape
    assert K == K2
    xb = x.astype(jnp.bfloat16)
    wb = w.astype(jnp.bfloat16)

    return pl.pallas_call(
        _gemm_kernel,
        out_shape=jax.ShapeDtypeStruct((B, M, N), out_dtype),
        grid=(B,),
        in_specs=[
            pl.BlockSpec((None, M, K), lambda b: (b, 0, 0)),   # squeezed -> 2-D ref
            pl.BlockSpec((None, K, N), lambda b: (b, 0, 0)),
        ],
        out_specs=pl.BlockSpec((None, M, N), lambda b: (b, 0, 0)),
        compiler_params=pltpu.CompilerParams(dimension_semantics=("parallel",)),
    )(xb, wb)


def bn_act(x, gamma, beta, relu, residual=None):
    """x: (B, H, W, C) NHWC.  Training-mode BatchNorm2d (+residual, +ReLU)."""
    B, H, W, C = x.shape
    M = B * H * W
    xr = x.reshape(M, C)
    g = gamma.reshape(1, C).astype(jnp.float32)
    b = beta.reshape(1, C).astype(jnp.float32)

    tc = 128 if (C > 128 and C % 128 == 0) else C   # channel tiling when wide
    grid = (C // tc,)

    in_specs = [pl.BlockSpec((M, tc), lambda i: (0, i))]
    args = [xr]
    if residual is not None:
        in_specs.append(pl.BlockSpec((M, tc), lambda i: (0, i)))
        args.append(residual.reshape(M, C))
        kernel = functools.partial(_bn_res_kernel, count=float(M), relu=relu)
    else:
        kernel = functools.partial(_bn_kernel, count=float(M), relu=relu)
    in_specs += [
        pl.BlockSpec((1, tc), lambda i: (0, i)),
        pl.BlockSpec((1, tc), lambda i: (0, i)),
    ]
    args += [g, b]

    out = pl.pallas_call(
        kernel,
        out_shape=jax.ShapeDtypeStruct((M, C), x.dtype),
        grid=grid,
        in_specs=in_specs,
        out_specs=pl.BlockSpec((M, tc), lambda i: (0, i)),
        compiler_params=pltpu.CompilerParams(dimension_semantics=("parallel",)),
    )(*args)
    return out.reshape(B, H, W, C)


# -----------------------------------------------------------------------------
# Plain-JAX glue (overhead-dominated pieces at this scale)
# -----------------------------------------------------------------------------
def maxpool3x3s2(x):
    """MaxPool2d(kernel=3, stride=2, padding=1), fused jnp.maximum tree."""
    B, H, W, C = x.shape
    stride, pad, k = 2, 1, 3
    xp = jnp.pad(x, ((0, 0), (pad, pad), (pad, pad), (0, 0)),
                 constant_values=-jnp.inf)
    Ho = (H + 2 * pad - k) // stride + 1
    Wo = (W + 2 * pad - k) // stride + 1
    out = None
    for i in range(k):
        for j in range(k):
            win = xp[:, i:i + stride * (Ho - 1) + 1:stride,
                       j:j + stride * (Wo - 1) + 1:stride, :]
            out = win if out is None else jnp.maximum(out, win)
    return out


def _im2col(x, kh, kw, stride, pad):
    """NHWC -> (B, Ho*Wo, kh*kw*C) patches in bf16."""
    x = x.astype(jnp.bfloat16)
    B, H, W, C = x.shape
    xp = jnp.pad(x, ((0, 0), (pad, pad), (pad, pad), (0, 0)))
    Ho = (H + 2 * pad - kh) // stride + 1
    Wo = (W + 2 * pad - kw) // stride + 1
    cols = []
    for i in range(kh):
        for j in range(kw):
            cols.append(xp[:, i:i + stride * (Ho - 1) + 1:stride,
                           j:j + stride * (Wo - 1) + 1:stride, :])
    patches = jnp.stack(cols, axis=3)                 # (B, Ho, Wo, kh*kw, C)
    return patches.reshape(B, Ho * Wo, kh * kw * C), Ho, Wo


def conv2d(x, w, stride, pad):
    """Shared-weight conv (no bias): im2col + B-collapsed Pallas GEMM."""
    cout, cin, kh, kw = w.shape
    B = x.shape[0]
    patches, Ho, Wo = _im2col(x, kh, kw, stride, pad)
    x2 = patches.reshape(B * Ho * Wo, kh * kw * cin)
    wm = jnp.transpose(w, (2, 3, 1, 0)).reshape(kh * kw * cin, cout)
    y = gemm_shared(x2, wm)
    return y.reshape(B, Ho, Wo, cout)


def dyconv2d(x, p, stride, pad, temperature):
    """DynamicConvolution: attention over K kernels -> per-sample aggregated conv."""
    B, H, W, Cin = x.shape
    K_, Cout, _, kh, kw = p['weight'].shape
    # attention branch (tiny compute, kept in plain JAX)
    gap = jnp.mean(x.astype(jnp.float32), axis=(1, 2))                 # (B, Cin)
    z = jax.nn.relu(gap @ p['fc1_w'].T + p['fc1_b'])
    logits = z @ p['fc2_w'].T + p['fc2_b']
    att = jax.nn.softmax(logits / temperature, axis=-1)                # (B, K)
    Wagg = jnp.einsum('bk,koihw->boihw', att, p['weight'])             # (B,Cout,Cin,kh,kw)
    wm = jnp.transpose(Wagg, (0, 3, 4, 2, 1)).reshape(B, kh * kw * Cin, Cout)
    patches, Ho, Wo = _im2col(x, kh, kw, stride, pad)
    y = gemm_batched(patches, wm)                                      # per-sample GEMM
    return y.reshape(B, Ho, Wo, Cout)


# -----------------------------------------------------------------------------
# Parameter initialization (deterministic, mirrors the torch __init__)
# -----------------------------------------------------------------------------
NUM_DY_KERNELS = 4   # TODO(synk): DynamicConvolution source not given; assume K=4, reduction=4, no bias.


def _conv_init(key, cout, cin, kh, kw):
    n = kh * kw * cout
    return jax.random.normal(key, (cout, cin, kh, kw), jnp.float32) * math.sqrt(2.0 / n)


def _init_dyconv(key, cin, cout, kh=3, kw=3, K=NUM_DY_KERNELS, reduction=4):
    k1, k2, k3 = jax.random.split(key, 3)
    hidden = max(cin // reduction, 4)
    weight = jax.random.normal(k1, (K, cout, cin, kh, kw), jnp.float32) * math.sqrt(
        2.0 / (kh * kw * cout))
    return dict(
        weight=weight,
        fc1_w=jax.random.normal(k2, (hidden, cin), jnp.float32) * (1.0 / cin),
        fc1_b=jnp.zeros((hidden,), jnp.float32),
        fc2_w=jax.random.normal(k3, (K, hidden), jnp.float32) * (1.0 / hidden),
        fc2_b=jnp.zeros((K,), jnp.float32),
    )


def _init_block(key, cin, planes, stride):
    ks = jax.random.split(key, 3)
    p = dict(
        stride=stride,
        conv1=_init_dyconv(ks[0], cin, planes),
        bn1_g=jnp.ones((planes,), jnp.float32), bn1_b=jnp.zeros((planes,), jnp.float32),
        conv2=_init_dyconv(ks[1], planes, planes),
        bn2_g=jnp.ones((planes,), jnp.float32), bn2_b=jnp.zeros((planes,), jnp.float32),
    )
    if stride != 1 or cin != planes:        # BasicBlock expansion = 1
        p['sc_w'] = _conv_init(ks[2], planes, cin, 1, 1)
        p['sc_bn_g'] = jnp.ones((planes,), jnp.float32)
        p['sc_bn_b'] = jnp.zeros((planes,), jnp.float32)
    return p


def init_resnet(key, num_blocks=(1, 1, 1, 1), num_classes=10, in_planes=16, scale=0.25):
    keys = jax.random.split(key, 4)
    params = dict(
        conv1_w=_conv_init(keys[0], in_planes, 3, 7, 7),
        bn1_g=jnp.ones((in_planes,), jnp.float32),
        bn1_b=jnp.zeros((in_planes,), jnp.float32),
    )
    cin = in_planes
    layer_keys = jax.random.split(keys[1], 4)
    layers = []
    base = (64, 128, 256, 512)
    strides0 = (1, 2, 2, 2)
    for li in range(4):
        planes = int(base[li] * scale)
        bkeys = jax.random.split(layer_keys[li], num_blocks[li])
        blocks = []
        for bi in range(num_blocks[li]):
            s = strides0[li] if bi == 0 else 1
            blocks.append(_init_block(bkeys[bi], cin, planes, s))
            cin = planes
        layers.append(blocks)
    params['layers'] = layers
    params['fc_w'] = _conv_init(keys[2], num_classes, cin, 1, 1)
    params['fc_b'] = jnp.zeros((num_classes,), jnp.float32)
    return params


# -----------------------------------------------------------------------------
# Forward pass
# -----------------------------------------------------------------------------
def basic_block(x, p, temperature):
    stride = p['stride']
    out = dyconv2d(x, p['conv1'], stride=stride, pad=1, temperature=temperature)
    out = bn_act(out, p['bn1_g'], p['bn1_b'], relu=True)
    out = dyconv2d(out, p['conv2'], stride=1, pad=1, temperature=temperature)
    if 'sc_w' in p:
        sc = conv2d(x, p['sc_w'], stride=stride, pad=0)
        sc = bn_act(sc, p['sc_bn_g'], p['sc_bn_b'], relu=False)
    else:
        sc = x
    # relu(bn2(conv2) + shortcut) — residual & relu fused into the BN kernel
    return bn_act(out, p['bn2_g'], p['bn2_b'], relu=True, residual=sc)


def resnet_forward(params, x_nchw, temperature=31.0):
    # NCHW -> NHWC, bf16 activations everywhere (f32 accumulation inside kernels)
    x = jnp.transpose(x_nchw, (0, 2, 3, 1)).astype(jnp.bfloat16)
    out = conv2d(x, params['conv1_w'], stride=2, pad=3)        # conv1 7x7/s2
    out = bn_act(out, params['bn1_g'], params['bn1_b'], relu=True)
    out = maxpool3x3s2(out)
    for blocks in params['layers']:
        for blk in blocks:
            out = basic_block(out, blk, temperature)
    feat = jnp.mean(out.astype(jnp.float32), axis=(1, 2))      # AdaptiveAvgPool2d((1,1))
    w_fc = params['fc_w'][:, :, 0, 0]                          # fc = 1x1 conv, tiny -> plain JAX
    logits = feat @ w_fc.T + params['fc_b']
    return logits                                              # (B, num_classes)


# -----------------------------------------------------------------------------
if __name__ == "__main__":
    key = jax.random.PRNGKey(0)
    pkey, xkey = jax.random.split(key)
    params = init_resnet(pkey, num_blocks=(1, 1, 1, 1), num_classes=10,
                         in_planes=16, scale=0.25)
    x = jax.random.normal(xkey, (2, 3, 32, 32), jnp.float32)    # NCHW, like PyTorch
    logits = resnet_forward(params, x, temperature=31.0)
    jax.block_until_ready(logits)
    assert logits.shape == (2, 10) and bool(jnp.all(jnp.isfinite(logits)))
    print("KERNEL_OK")
</pallas_src>

<mosaic_0001>
module attributes {stable_mosaic.version = 11 : i64} {
  func.func @_gemm_kernel(%arg0: i32, %arg1: memref<256x147xbf16, #tpu.memory_space<vmem>>, %arg2: memref<147x16xbf16, #tpu.memory_space<vmem>>, %arg3: memref<256x16xbf16, #tpu.memory_space<vmem>>) attributes {dimension_semantics = [#tpu.dimension_semantics<parallel>], iteration_bounds = array<i64: 2>, scalar_prefetch = 0 : i64, scratch_operands = 0 : i64, tpu.core_type = #tpu.core_type<tc>, window_params = [{transform_indices = @transform_0, window_bounds = array<i64: 256, 147>}, {pipeline_mode = #tpu.pipeline_mode<synchronous>, transform_indices = @transform_1, window_bounds = array<i64: 147, 16>}, {transform_indices = @transform_2, window_bounds = array<i64: 256, 16>}]} {
    %c0 = arith.constant 0 : index
    %c0_0 = arith.constant 0 : index
    %0 = vector.load %arg1[%c0, %c0_0] : memref<256x147xbf16, #tpu.memory_space<vmem>>, vector<256x147xbf16>
    %c0_1 = arith.constant 0 : index
    %c0_2 = arith.constant 0 : index
    %1 = vector.load %arg2[%c0_1, %c0_2] : memref<147x16xbf16, #tpu.memory_space<vmem>>, vector<147x16xbf16>
    %cst = arith.constant dense<0.000000e+00> : vector<256x16xf32>
    %2 = tpu.matmul %0, %1, %cst {dimension_numbers = #tpu.dot_dimension_numbers<[1], [0], [0], [1], [0, 0, 1, 1], [], []>} : vector<256x147xbf16>, vector<147x16xbf16>, vector<256x16xf32> -> vector<256x16xf32>
    %3 = arith.truncf %2 : vector<256x16xf32> to vector<256x16xbf16>
    %c0_3 = arith.constant 0 : index
    %c0_4 = arith.constant 0 : index
    %4 = vector.load %arg3[%c0_3, %c0_4] : memref<256x16xbf16, #tpu.memory_space<vmem>>, vector<256x16xbf16>
    tpu.vector_store %arg3[%c0_3, %c0_4], %3 {strides = array<i32>} : memref<256x16xbf16, #tpu.memory_space<vmem>>, vector<256x16xbf16>,
    return
  }
  func.func @transform_0(%arg0: i32) -> (i32, i32) {
    %c0_i32 = arith.constant 0 : i32
    %c0_i32_0 = arith.constant 0 : i32
    return %arg0, %c0_i32 : i32, i32
  }
  func.func @transform_1(%arg0: i32) -> (i32, i32) {
    %c0_i32 = arith.constant 0 : i32
    %c0_i32_0 = arith.constant 0 : i32
    %c0_i32_1 = arith.constant 0 : i32
    return %c0_i32, %c0_i32_0 : i32, i32
  }
  func.func @transform_2(%arg0: i32) -> (i32, i32) {
    %c0_i32 = arith.constant 0 : i32
    %c0_i32_0 = arith.constant 0 : i32
    return %arg0, %c0_i32 : i32, i32
  }
}

</mosaic_0001>

<llo_original>
// kernel: tpu_custom_call.1
$region0: #{tpu_custom_call.1}
  #allocation0 [shape = 'u32[]', space=smem, size = 0x4, offset = 0x4, fixed_abs, tag = 'smem constant byte address 0x4 - core index']
  #allocation1 [shape = 'u32[144,128]{1,0:T(1,128)}', space=vmem, size = 0x12000, scoped, tag = 'internal scratch']
  %s0 = inlined_call_operand.vmem [shape: bf16[512,147], index: 0, kind: input, shape index: {}]
  %s1 = inlined_call_operand.vmem [shape: bf16[147,16], index: 1, kind: input, shape index: {}]
  %s2 = inlined_call_operand.vmem [shape: bf16[512,16], index: 2, kind: output, shape index: {}]
  %s3 = sld [smem:[#allocation0]]
  $region41: #{tpu_custom_call.1} parent=0
    _
  %s5 = ssub.s32 1, %s3
  %s6 = scalar_select 0, %s5, %s3
  loop: start=0, step=1, limit=4
  $region2: #{tpu_custom_call.1} parent=0 // loop_pre_header
    _
  $region3: #{tpu_custom_call.1} parent=0 // loop_header
    %s8 = sphi 0, %s12
    %p9 = scmp.ge.s32.totalorder %s8, 4
    %s18 = sphi 0, %s20
    %s21 = sphi 0, %s18
    %s22 = sphi 0, %s21
    %s38 = sphi 0, %s22
    %s42 = sphi 0, %s42
    %s44 = sphi 0, %s42
    %s45 = sphi 0, %s44
    %s59 = sphi 0, %s45
    %s65 = sphi 0, %s67
    %s68 = sphi 0, %s65
    %s69 = sphi 0, %s68
    %s85 = sphi 0, %s69
  $region4: #{tpu_custom_call.1} parent=0 // loop_header_branch
    %11 = sbr.rel (%p9) target = $region8
  $region5: #{tpu_custom_call.1} parent=0 // loop_body
    %s13 = ssub.s32 %s8, 1
    %s14 = ssub.s32 %s8, 2
    %s15 = sadd.s32 %s8, 1
    %s16 = ssub.s32 %s8, %s15
    %p17 = scmp.eq.s32.totalorder %s16, 0
    %s19 = sadd.s32 %s18, 1
    %s20 = scalar_select %p17, %s18, %s19
    %p23 = pneg %p17
    %p24 = scmp.eq.s32.totalorder %s8, 1
    %p25 = por %p23, %p24
    %p26 = scmp.ne.s32.totalorder %s18, %s21
    %p27 = scmp.eq.s32.totalorder %s8, 0
    %p28 = por %p26, %p27
    %p29 = scmp.ne.s32.totalorder %s18, %s21
    %p30 = scmp.eq.s32.totalorder %s13, 1
    %p31 = por %p29, %p30
    %p32 = scmp.ne.s32.totalorder %s21, %s22
    %p33 = scmp.eq.s32.totalorder %s13, 0
    %p34 = por %p32, %p33
    %p35 = scmp.ne.s32.totalorder %s21, %s22
    %p36 = scmp.eq.s32.totalorder %s14, 1
    %p37 = por %p35, %p36
    %p39 = scmp.ne.s32.totalorder %s22, %s38
    %p40 = scmp.eq.s32.totalorder %s14, 0
    %p41 = por %p39, %p40
    %s43 = sadd.s32 %s42, 1
    %p46 = scmp.eq.s32.totalorder %s8, 1
    %p47 = scmp.ne.s32.totalorder %s42, %s44
    %p48 = scmp.eq.s32.totalorder %s8, 0
    %p49 = por %p47, %p48
    %p50 = scmp.ne.s32.totalorder %s42, %s44
    %p51 = scmp.eq.s32.totalorder %s13, 1
    %p52 = por %p50, %p51
    %p53 = scmp.ne.s32.totalorder %s44, %s45
    %p54 = scmp.eq.s32.totalorder %s13, 0
    %p55 = por %p53, %p54
    %p56 = scmp.ne.s32.totalorder %s44, %s45
    %p57 = scmp.eq.s32.totalorder %s14, 1
    %p58 = por %p56, %p57
    %p60 = scmp.ne.s32.totalorder %s45, %s59
    %p61 = scmp.eq.s32.totalorder %s14, 0
    %p62 = por %p60, %p61
    %s63 = ssub.s32 %s8, %s15
    %p64 = scmp.eq.s32.totalorder %s63, 0
    %s66 = sadd.s32 %s65, 1
    %s67 = scalar_select %p64, %s65, %s66
    %p70 = pneg %p64
    %p71 = scmp.eq.s32.totalorder %s8, 1
    %p72 = por %p70, %p71
    %p73 = scmp.ne.s32.totalorder %s65, %s68
    %p74 = scmp.eq.s32.totalorder %s8, 0
    %p75 = por %p73, %p74
    %p76 = scmp.ne.s32.totalorder %s65, %s68
    %p77 = scmp.eq.s32.totalorder %s13, 1
    %p78 = por %p76, %p77
    %p79 = scmp.ne.s32.totalorder %s68, %s69
    %p80 = scmp.eq.s32.totalorder %s13, 0
    %p81 = por %p79, %p80
    %p82 = scmp.ne.s32.totalorder %s68, %s69
    %p83 = scmp.eq.s32.totalorder %s14, 1
    %p84 = por %p82, %p83
    %p86 = scmp.ne.s32.totalorder %s69, %s85
    %p87 = scmp.eq.s32.totalorder %s14, 0
    %p88 = por %p86, %p87
    %p89 = scmp.le.s32.totalorder 1, %s8
    %p90 = scmp.lt.s32.totalorder %s8, 3
    %p91 = pnand %p89, %p90
    %p92 = pneg %p91
    // Predicated region
    $region9: #{tpu_custom_call.1} parent=5 // pred_check
      _
    $region10: #{tpu_custom_call.1} parent=5 // pred_check_branch
      %94 = sbr.rel (%p91) target = $region12
    $region11: #{tpu_custom_call.1} parent=5 // pred_region
      %s95 = ssub.s32 %s8, 1
      // Predicated region
      $region13: #{tpu_custom_call.1} parent=11 // pred_check
        %p96 = pneg %p55
      $region14: #{tpu_custom_call.1} parent=11 // pred_check_branch
        %98 = sbr.rel (%p96) target = $region16
      $region15: #{tpu_custom_call.1} parent=11 // pred_region
        _
      $region16: #{tpu_custom_call.1} parent=11 // pred_fallthru
        _
    $region12: #{tpu_custom_call.1} parent=5 // pred_fallthru
      _
    %p99 = scmp.lt.s32.totalorder %s8, 2
    // Predicated region
    $region17: #{tpu_custom_call.1} parent=5 // pred_check
      %p100 = pneg %p99
    $region18: #{tpu_custom_call.1} parent=5 // pred_check_branch
      %102 = sbr.rel (%p100) target = $region20
    $region19: #{tpu_custom_call.1} parent=5 // pred_region
      // Predicated region
      $region21: #{tpu_custom_call.1} parent=19 // pred_check
        %p103 = pneg %p28
      $region22: #{tpu_custom_call.1} parent=19 // pred_check_branch
        %105 = sbr.rel (%p103) target = $region24
      $region23: #{tpu_custom_call.1} parent=19 // pred_region
        %s106 = smul.u32 32, %s8
        %p107 = scmp.lt.s32.totalorder %s106, 63
        %s108 = scalar_select %p107, %s106, 63
        %s109 = smul.addr %s108, 2
        %s110 = smul.addr %s109, 4
        %s111 = scalar_lea.vmem %s0, %s110
        %s112 = smul.u32 32, %s8
      $region24: #{tpu_custom_call.1} parent=19 // pred_fallthru
        _
    $region20: #{tpu_custom_call.1} parent=5 // pred_fallthru
      _
    %p113 = scmp.le.s32.totalorder 1, %s8
    %p114 = scmp.lt.s32.totalorder %s8, 3
    %p115 = pnand %p113, %p114
    %p116 = pneg %p115
    // Predicated region
    $region25: #{tpu_custom_call.1} parent=5 // pred_check
      _
    $region26: #{tpu_custom_call.1} parent=5 // pred_check_branch
      %118 = sbr.rel (%p115) target = $region28
    $region27: #{tpu_custom_call.1} parent=5 // pred_region
      %s119 = ssub.s32 %s8, 1
      %s120 = smul.u32 32, %s13
      %p121 = scmp.lt.s32.totalorder %s120, 63
      %s122 = scalar_select %p121, %s120, 63
      %s123 = smul.addr %s122, 2
      %s124 = smul.addr %s123, 4
      %s125 = scalar_lea.vmem %s0, %s124
      %p126 = pneg %p34
      %p127 = pneg %p31
      %p128 = pneg %p55
      %p129 = pneg %p52
      %p130 = pneg %p81
      %p131 = pneg %p78
      %s132 = smul.u32 32, %s13
      %p133 = scmp.lt.s32.totalorder %s132, 63
      %s134 = scalar_select %p133, %s132, 63
      %s135 = smul.addr %s134, 4
      %s136 = scalar_lea.vmem %s2, %s135
      %s137 = smul.u32 32, %s13
      %p138 = scmp.lt.s32.totalorder %s137, 63
      %s139 = scalar_select %p138, %s137, 63
      %s140 = smul.addr %s139, 2
      %s141 = smul.addr %s140, 4
      %s142 = scalar_lea.vmem %s0, %s141
      %s143 = smul.u32 32, %s13
      %s144 = smul.u32 32, %s13
      %p145 = scmp.lt.s32.totalorder %s144, 63
      %s146 = scalar_select %p145, %s144, 63
      %s147 = smul.addr %s146, 4
      %s148 = scalar_lea.vmem %s2, %s147
      %s149 = smul.u32 32, %s13
      %v151 = vld [vmem:[%s142] sm:$0xff]
      %v152 = vld [vmem:[%s142 + $0x8] sm:$0xff]
      %v153 = vld [vmem:[%s142 + $0x10] sm:$0xff]
      %v154 = vld [vmem:[%s142 + $0x18] sm:$0xff]
      %v155 = vld [vmem:[%s142 + $0x20] sm:$0xff]
      %v156 = vld [vmem:[%s142 + $0x28] sm:$0xff]
      %v157 = vld [vmem:[%s142 + $0x30] sm:$0xff]
      %v158 = vld [vmem:[%s142 + $0x38] sm:$0xff]
      %v159 = vld [vmem:[%s142 + $0x40] sm:$0xff]
      %v160 = vld [vmem:[%s142 + $0x48] sm:$0xff]
      %v161 = vld [vmem:[%s142 + $0x50] sm:$0xff]
      %v162 = vld [vmem:[%s142 + $0x58] sm:$0xff]
      %v163 = vld [vmem:[%s142 + $0x60] sm:$0xff]
      %v164 = vld [vmem:[%s142 + $0x68] sm:$0xff]
      %v165 = vld [vmem:[%s142 + $0x70] sm:$0xff]
      %v166 = vld [vmem:[%s142 + $0x78] sm:$0xff]
      %v167 = vld [vmem:[%s142 + $0x80] sm:$0xff]
      %v168 = vld [vmem:[%s142 + $0x88] sm:$0xff]
      %v169 = vld [vmem:[%s142 + $0x90] sm:$0xff]
      %v170 = vld [vmem:[%s142 + $0x98] sm:$0xff]
      %v171 = vld [vmem:[%s142 + $0xa0] sm:$0xff]
      %v172 = vld [vmem:[%s142 + $0xa8] sm:$0xff]
      %v173 = vld [vmem:[%s142 + $0xb0] sm:$0xff]
      %v174 = vld [vmem:[%s142 + $0xb8] sm:$0xff]
      %v175 = vld [vmem:[%s142 + $0xc0] sm:$0xff]
      %v176 = vld [vmem:[%s142 + $0xc8] sm:$0xff]
      %v177 = vld [vmem:[%s142 + $0xd0] sm:$0xff]
      %v178 = vld [vmem:[%s142 + $0xd8] sm:$0xff]
      %v179 = vld [vmem:[%s142 + $0xe0] sm:$0xff]
      %v180 = vld [vmem:[%s142 + $0xe8] sm:$0xff]
      %v181 = vld [vmem:[%s142 + $0xf0] sm:$0xff]
      %v182 = vld [vmem:[%s142 + $0xf8] sm:$0xff]
      %v183 = vld [vmem:[%s1] sm:$0xf]
      %v184 = vld [vmem:[%s1 + $0x4] sm:$0xf]
      %v185 = vld [vmem:[%s1 + $0x8] sm:$0xf]
      %v186 = vld [vmem:[%s1 + $0xc] sm:$0xf]
      %v187 = vld [vmem:[%s1 + $0x10] sm:$0xf]
      %v188 = vld [vmem:[%s1 + $0x14] sm:$0xf]
      %v189 = vld [vmem:[%s1 + $0x18] sm:$0xf]
      %v190 = vld [vmem:[%s1 + $0x1c] sm:$0xf]
      %v191 = vld [vmem:[%s1 + $0x20] sm:$0xf]
      %v192 = vld [vmem:[%s1 + $0x24] sm:$0xf]
      %v193 = vld [vmem:[%s1 + $0x28] sm:$0xf]
      %v194 = vld [vmem:[%s1 + $0x2c] sm:$0xf]
      %v195 = vld [vmem:[%s1 + $0x30] sm:$0xf]
      %v196 = vld [vmem:[%s1 + $0x34] sm:$0xf]
      %v197 = vld [vmem:[%s1 + $0x38] sm:$0xf]
      %v198 = vld [vmem:[%s1 + $0x3c] sm:$0xf]
      %v199 = vld [vmem:[%s1 + $0x40] sm:$0xf]
      %v200 = vld [vmem:[%s1 + $0x44] sm:$0xf]
      %v201 = vld [vmem:[%s1 + $0x48] sm:$0x3]
      %v234 = vunpack.c.l.b16 %v151
      %v235 = vunpack.c.h.b16 %v151
      %v236 = vunpack.c.l.b16 %v152
      %v237 = vunpack.c.h.b16 %v152
      %v238 = vunpack.c.l.b16 %v153
      %v239 = vunpack.c.h.b16 %v153
      %v240 = vunpack.c.l.b16 %v154
      %v241 = vunpack.c.h.b16 %v154
      %v242 = vunpack.c.l.b16 %v155
      %v243 = vunpack.c.h.b16 %v155
      %v244 = vunpack.c.l.b16 %v156
      %v245 = vunpack.c.h.b16 %v156
      %v246 = vunpack.c.l.b16 %v157
      %v247 = vunpack.c.h.b16 %v157
      %v248 = vunpack.c.l.b16 %v158
      %v249 = vunpack.c.h.b16 %v158
      %v250 = vunpack.c.l.b16 %v159
      %v251 = vunpack.c.h.b16 %v159
      %v252 = vunpack.c.l.b16 %v160
      %v253 = vunpack.c.h.b16 %v160
      %v254 = vunpack.c.l.b16 %v161
      %v255 = vunpack.c.h.b16 %v161
      %v256 = vunpack.c.l.b16 %v162
      %v257 = vunpack.c.h.b16 %v162
      %v258 = vunpack.c.l.b16 %v163
      %v259 = vunpack.c.h.b16 %v163
      %v260 = vunpack.c.l.b16 %v164
      %v261 = vunpack.c.h.b16 %v164
      %v262 = vunpack.c.l.b16 %v165
      %v263 = vunpack.c.h.b16 %v165
      %v264 = vunpack.c.l.b16 %v166
      %v265 = vunpack.c.h.b16 %v166
      %v266 = vunpack.c.l.b16 %v167
      %v267 = vunpack.c.h.b16 %v167
      %v268 = vunpack.c.l.b16 %v168
      %v269 = vunpack.c.h.b16 %v168
      %v270 = vunpack.c.l.b16 %v169
      %v271 = vunpack.c.h.b16 %v169
      %v272 = vunpack.c.l.b16 %v170
      %v273 = vunpack.c.h.b16 %v170
      %v274 = vunpack.c.l.b16 %v171
      %v275 = vunpack.c.h.b16 %v171
      %v276 = vunpack.c.l.b16 %v172
      %v277 = vunpack.c.h.b16 %v172
      %v278 = vunpack.c.l.b16 %v173
      %v279 = vunpack.c.h.b16 %v173
      %v280 = vunpack.c.l.b16 %v174
      %v281 = vunpack.c.h.b16 %v174
      %v282 = vunpack.c.l.b16 %v175
      %v283 = vunpack.c.h.b16 %v175
      %v284 = vunpack.c.l.b16 %v176
      %v285 = vunpack.c.h.b16 %v176
      %v286 = vunpack.c.l.b16 %v177
      %v287 = vunpack.c.h.b16 %v177
      %v288 = vunpack.c.l.b16 %v178
      %v289 = vunpack.c.h.b16 %v178
      %v290 = vunpack.c.l.b16 %v179
      %v291 = vunpack.c.h.b16 %v179
      %v292 = vunpack.c.l.b16 %v180
      %v293 = vunpack.c.h.b16 %v180
      %v294 = vunpack.c.l.b16 %v181
      %v295 = vunpack.c.h.b16 %v181
      %v296 = vunpack.c.l.b16 %v182
      %v297 = vunpack.c.h.b16 %v182
      %v298 = vpack.c.b16 %v236, %v234
      %v299 = vpack.c.b16 %v237, %v235
      %v300 = vpack.c.b16 %v240, %v238
      %v301 = vpack.c.b16 %v241, %v239
      %v302 = vpack.c.b16 %v244, %v242
      %v303 = vpack.c.b16 %v245, %v243
      %v304 = vpack.c.b16 %v248, %v246
      %v305 = vpack.c.b16 %v249, %v247
      %v306 = vpack.c.b16 %v252, %v250
      %v307 = vpack.c.b16 %v253, %v251
      %v308 = vpack.c.b16 %v256, %v254
      %v309 = vpack.c.b16 %v257, %v255
      %v310 = vpack.c.b16 %v260, %v258
      %v311 = vpack.c.b16 %v261, %v259
      %v312 = vpack.c.b16 %v264, %v262
      %v313 = vpack.c.b16 %v265, %v263
      %v314 = vpack.c.b16 %v268, %v266
      %v315 = vpack.c.b16 %v269, %v267
      %v316 = vpack.c.b16 %v272, %v270
      %v317 = vpack.c.b16 %v273, %v271
      %v318 = vpack.c.b16 %v276, %v274
      %v319 = vpack.c.b16 %v277, %v275
      %v320 = vpack.c.b16 %v280, %v278
      %v321 = vpack.c.b16 %v281, %v279
      %v322 = vpack.c.b16 %v284, %v282
      %v323 = vpack.c.b16 %v285, %v283
      %v324 = vpack.c.b16 %v288, %v286
      %v325 = vpack.c.b16 %v289, %v287
      %v326 = vpack.c.b16 %v292, %v290
      %v327 = vpack.c.b16 %v293, %v291
      %v328 = vpack.c.b16 %v296, %v294
      %v329 = vpack.c.b16 %v297, %v295
      %v365 = vunpack.c.l.b16 %v183
      %v366 = vunpack.c.l.b16 %v184
      %v367 = vunpack.c.l.b16 %v185
      %v368 = vunpack.c.l.b16 %v186
      %v369 = vunpack.c.l.b16 %v187
      %v370 = vunpack.c.l.b16 %v188
      %v371 = vunpack.c.l.b16 %v189
      %v372 = vunpack.c.l.b16 %v190
      %v373 = vunpack.c.l.b16 %v191
      %v374 = vunpack.c.l.b16 %v192
      %v375 = vunpack.c.l.b16 %v193
      %v376 = vunpack.c.l.b16 %v194
      %v377 = vunpack.c.l.b16 %v195
      %v378 = vunpack.c.l.b16 %v196
      %v379 = vunpack.c.l.b16 %v197
      %v380 = vunpack.c.l.b16 %v198
      %v381 = vunpack.c.l.b16 %v199
      %v382 = vunpack.c.l.b16 %v200
      %v383 = vunpack.c.l.b16 %v201
      %v384 = vpack.c.b16 %v366, %v365
      %v385 = vpack.c.b16 %v368, %v367
      %v386 = vpack.c.b16 %v370, %v369
      %v387 = vpack.c.b16 %v372, %v371
      %v388 = vpack.c.b16 %v374, %v373
      %v389 = vpack.c.b16 %v376, %v375
      %v390 = vpack.c.b16 %v378, %v377
      %v391 = vpack.c.b16 %v380, %v379
      %v392 = vpack.c.b16 %v382, %v381
      %v393 = vpack.c.b16 %v383, %v383
      %vm403 = vcmask 154624
      %v405 = vsel %vm403, %v299, 0
      %v408 = vsel %vm403, %v301, 0
      %v411 = vsel %vm403, %v303, 0
      %v414 = vsel %vm403, %v305, 0
      %v417 = vsel %vm403, %v307, 0
      %v420 = vsel %vm403, %v309, 0
      %v423 = vsel %vm403, %v311, 0
      %v426 = vsel %vm403, %v313, 0
      %v429 = vsel %vm403, %v315, 0
      %v432 = vsel %vm403, %v317, 0
      %v435 = vsel %vm403, %v319, 0
      %v438 = vsel %vm403, %v321, 0
      %v441 = vsel %vm403, %v323, 0
      %v444 = vsel %vm403, %v325, 0
      %v447 = vsel %vm403, %v327, 0
      %v450 = vsel %vm403, %v329, 0
      %vm452 = vcmask 1040384
      %vm453 = vcmask 1041408
      %v454 = vsel %vm452, 4294967295, 65535
      %v455 = vsel %vm453, %v454, 0
      %v457 = vand.u32 %v393, %v455
      %459 = vmatprep.subr.bf16.mxu0 0
      %460 = vmatpush1.bf16.msra.mxu0 %v384
      %461 = vmatprep.subr.bf16.mxu0 0
      %462 = vmatpush1.bf16.msra.mxu0 %v385
      %463 = vmatprep.subr.bf16.mxu0 0
      %464 = vmatpush1.bf16.msra.mxu0 %v386
      %465 = vmatprep.subr.bf16.mxu0 0
      %466 = vmatpush1.bf16.msra.mxu0 %v387
      %467 = vmatprep.subr.bf16.mxu0 0
      %468 = vmatpush1.bf16.msra.mxu0 %v388
      %469 = vmatprep.subr.bf16.mxu0 0
      %470 = vmatpush1.bf16.msra.mxu0 %v389
      %471 = vmatprep.subr.bf16.mxu0 0
      %472 = vmatpush1.bf16.msra.mxu0 %v390
      %473 = vmatprep.subr.bf16.mxu0 0
      %474 = vmatpush1.bf16.msra.mxu0 %v391
      %475 = vmatprep.subr.bf16.mxu0 0
      %476 = vmatpush1.bf16.msra.mxu0 %v392
      %477 = vmatprep.subr.bf16.mxu0 0
      %478 = vmatpush1.bf16.msra.mxu0 %v457
      %479 = vmatprep.subr.bf16.mxu0 0
      %480 = vmatpush1.bf16.msra.mxu0 0
      %481 = vmatprep.subr.bf16.mxu0 0
      %482 = vmatpush1.bf16.msra.mxu0 0
      %483 = vmatprep.subr.bf16.mxu0 0
      %484 = vmatpush1.bf16.msra.mxu0 0
      %485 = vmatprep.subr.bf16.mxu0 0
      %486 = vmatpush1.bf16.msra.mxu0 0
      %487 = vmatprep.subr.bf16.mxu0 0
      %488 = vmatpush1.bf16.msra.mxu0 0
      %489 = vmatprep.subr.bf16.mxu0 0
      %490 = vmatpush1.bf16.msra.mxu0 0
      %491 = vmatprep.mubr.bf16.mxu0 %v405
      %492 = vmatmul.mubr.bf16.gmra.mrb[0].mxu0 %v298
      %v493 = vpop.f32.mrb[0].mxu0
      %v494 = vadd.f32 0.0, %v493
      %v495 = vpop.f32.mrb[0].mxu0
      %v496 = vpop.f32.mrb[0].mxu0
      %v497 = vadd.f32 0.0, %v496
      %v498 = vpop.f32.mrb[0].mxu0
      %499 = vmatprep.mubr.bf16.mxu0 %v408
      %500 = vmatmul.mubr.bf16.gmra.mrb[0].mxu0 %v300
      %v501 = vpop.f32.mrb[0].mxu0
      %v502 = vadd.f32 0.0, %v501
      %v503 = vpop.f32.mrb[0].mxu0
      %v504 = vpop.f32.mrb[0].mxu0
      %v505 = vadd.f32 0.0, %v504
      %v506 = vpop.f32.mrb[0].mxu0
      %507 = vmatprep.mubr.bf16.mxu0 %v411
      %508 = vmatmul.mubr.bf16.gmra.mrb[0].mxu0 %v302
      %v509 = vpop.f32.mrb[0].mxu0
      %v510 = vadd.f32 0.0, %v509
      %v511 = vpop.f32.mrb[0].mxu0
      %v512 = vpop.f32.mrb[0].mxu0
      %v513 = vadd.f32 0.0, %v512
      %v514 = vpop.f32.mrb[0].mxu0
      %515 = vmatprep.mubr.bf16.mxu0 %v414
      %516 = vmatmul.mubr.bf16.gmra.mrb[0].mxu0 %v304
      %v517 = vpop.f32.mrb[0].mxu0
      %v518 = vadd.f32 0.0, %v517
      %v519 = vpop.f32.mrb[0].mxu0
      %v520 = vpop.f32.mrb[0].mxu0
      %v521 = vadd.f32 0.0, %v520
      %v522 = vpop.f32.mrb[0].mxu0
      %523 = vmatprep.mubr.bf16.mxu0 %v417
      %524 = vmatmul.mubr.bf16.gmra.mrb[0].mxu0 %v306
      %v525 = vpop.f32.mrb[0].mxu0
      %v526 = vadd.f32 0.0, %v525
      %v527 = vpop.f32.mrb[0].mxu0
      %v528 = vpop.f32.mrb[0].mxu0
      %v529 = vadd.f32 0.0, %v528
      %v530 = vpop.f32.mrb[0].mxu0
      %531 = vmatprep.mubr.bf16.mxu0 %v420
      %532 = vmatmul.mubr.bf16.gmra.mrb[0].mxu0 %v308
      %v533 = vpop.f32.mrb[0].mxu0
      %v534 = vadd.f32 0.0, %v533
      %v535 = vpop.f32.mrb[0].mxu0
      %v536 = vpop.f32.mrb[0].mxu0
      %v537 = vadd.f32 0.0, %v536
      %v538 = vpop.f32.mrb[0].mxu0
      %539 = vmatprep.mubr.bf16.mxu0 %v423
      %540 = vmatmul.mubr.bf16.gmra.mrb[0].mxu0 %v310
      %v541 = vpop.f32.mrb[0].mxu0
      %v542 = vadd.f32 0.0, %v541
      %v543 = vpop.f32.mrb[0].mxu0
      %v544 = vpop.f32.mrb[0].mxu0
      %v545 = vadd.f32 0.0, %v544
      %v546 = vpop.f32.mrb[0].mxu0
      %547 = vmatprep.mubr.bf16.mxu0 %v426
      %548 = vmatmul.mubr.bf16.gmra.mrb[0].mxu0 %v312
      %v549 = vpop.f32.mrb[0].mxu0
      %v550 = vadd.f32 0.0, %v549
      %v551 = vpop.f32.mrb[0].mxu0
      %v552 = vpop.f32.mrb[0].mxu0
      %v553 = vadd.f32 0.0, %v552
      %v554 = vpop.f32.mrb[0].mxu0
      %555 = vmatprep.mubr.bf16.mxu0 %v429
      %556 = vmatmul.mubr.bf16.gmra.mrb[0].mxu0 %v314
      %v557 = vpop.f32.mrb[0].mxu0
      %v558 = vadd.f32 0.0, %v557
      %v559 = vpop.f32.mrb[0].mxu0
      %v560 = vpop.f32.mrb[0].mxu0
      %v561 = vadd.f32 0.0, %v560
      %v562 = vpop.f32.mrb[0].mxu0
      %563 = vmatprep.mubr.bf16.mxu0 %v432
      %564 = vmatmul.mubr.bf16.gmra.mrb[0].mxu0 %v316
      %v565 = vpop.f32.mrb[0].mxu0
      %v566 = vadd.f32 0.0, %v565
      %v567 = vpop.f32.mrb[0].mxu0
      %v568 = vpop.f32.mrb[0].mxu0
      %v569 = vadd.f32 0.0, %v568
      %v570 = vpop.f32.mrb[0].mxu0
      %571 = vmatprep.mubr.bf16.mxu0 %v435
      %572 = vmatmul.mubr.bf16.gmra.mrb[0].mxu0 %v318
      %v573 = vpop.f32.mrb[0].mxu0
      %v574 = vadd.f32 0.0, %v573
      %v575 = vpop.f32.mrb[0].mxu0
      %v576 = vpop.f32.mrb[0].mxu0
      %v577 = vadd.f32 0.0, %v576
      %v578 = vpop.f32.mrb[0].mxu0
      %579 = vmatprep.mubr.bf16.mxu0 %v438
      %580 = vmatmul.mubr.bf16.gmra.mrb[0].mxu0 %v320
      %v581 = vpop.f32.mrb[0].mxu0
      %v582 = vadd.f32 0.0, %v581
      %v583 = vpop.f32.mrb[0].mxu0
      %v584 = vpop.f32.mrb[0].mxu0
      %v585 = vadd.f32 0.0, %v584
      %v586 = vpop.f32.mrb[0].mxu0
      %587 = vmatprep.mubr.bf16.mxu0 %v441
      %588 = vmatmul.mubr.bf16.gmra.mrb[0].mxu0 %v322
      %v589 = vpop.f32.mrb[0].mxu0
      %v590 = vadd.f32 0.0, %v589
      %v591 = vpop.f32.mrb[0].mxu0
      %v592 = vpop.f32.mrb[0].mxu0
      %v593 = vadd.f32 0.0, %v592
      %v594 = vpop.f32.mrb[0].mxu0
      %595 = vmatprep.mubr.bf16.mxu0 %v444
      %596 = vmatmul.mubr.bf16.gmra.mrb[0].mxu0 %v324
      %v597 = vpop.f32.mrb[0].mxu0
      %v598 = vadd.f32 0.0, %v597
      %v599 = vpop.f32.mrb[0].mxu0
      %v600 = vpop.f32.mrb[0].mxu0
      %v601 = vadd.f32 0.0, %v600
      %v602 = vpop.f32.mrb[0].mxu0
      %603 = vmatprep.mubr.bf16.mxu0 %v447
      %604 = vmatmul.mubr.bf16.gmra.mrb[0].mxu0 %v326
      %v605 = vpop.f32.mrb[0].mxu0
      %v606 = vadd.f32 0.0, %v605
      %v607 = vpop.f32.mrb[0].mxu0
      %v608 = vpop.f32.mrb[0].mxu0
      %v609 = vadd.f32 0.0, %v608
      %v610 = vpop.f32.mrb[0].mxu0
      %611 = vmatprep.mubr.bf16.mxu0 %v450
      %612 = vmatmul.mubr.bf16.gmra.mrb[0].mxu0 %v328
      %v613 = vpop.f32.mrb[0].mxu0
      %v614 = vadd.f32 0.0, %v613
      %v615 = vpop.f32.mrb[0].mxu0
      %v616 = vpop.f32.mrb[0].mxu0
      %v617 = vadd.f32 0.0, %v616
      %v618 = vpop.f32.mrb[0].mxu0
      %619 = vdwg.mxu0
      %v620 = vpack.c.bf16 %v497, %v494
      %v621 = vpack.c.bf16 %v505, %v502
      %v622 = vpack.c.bf16 %v513, %v510
      %v623 = vpack.c.bf16 %v521, %v518
      %v624 = vpack.c.bf16 %v529, %v526
      %v625 = vpack.c.bf16 %v537, %v534
      %v626 = vpack.c.bf16 %v545, %v542
      %v627 = vpack.c.bf16 %v553, %v550
      %v628 = vpack.c.bf16 %v561, %v558
      %v629 = vpack.c.bf16 %v569, %v566
      %v630 = vpack.c.bf16 %v577, %v574
      %v631 = vpack.c.bf16 %v585, %v582
      %v632 = vpack.c.bf16 %v593, %v590
      %v633 = vpack.c.bf16 %v601, %v598
      %v634 = vpack.c.bf16 %v609, %v606
      %v635 = vpack.c.bf16 %v617, %v614
      %v652 = vunpack.c.l.b16 %v620
      %v653 = vunpack.c.h.b16 %v620
      %v654 = vunpack.c.l.b16 %v621
      %v655 = vunpack.c.h.b16 %v621
      %v656 = vunpack.c.l.b16 %v622
      %v657 = vunpack.c.h.b16 %v622
      %v658 = vunpack.c.l.b16 %v623
      %v659 = vunpack.c.h.b16 %v623
      %v660 = vunpack.c.l.b16 %v624
      %v661 = vunpack.c.h.b16 %v624
      %v662 = vunpack.c.l.b16 %v625
      %v663 = vunpack.c.h.b16 %v625
      %v664 = vunpack.c.l.b16 %v626
      %v665 = vunpack.c.h.b16 %v626
      %v666 = vunpack.c.l.b16 %v627
      %v667 = vunpack.c.h.b16 %v627
      %v668 = vunpack.c.l.b16 %v628
      %v669 = vunpack.c.h.b16 %v628
      %v670 = vunpack.c.l.b16 %v629
      %v671 = vunpack.c.h.b16 %v629
      %v672 = vunpack.c.l.b16 %v630
      %v673 = vunpack.c.h.b16 %v630
      %v674 = vunpack.c.l.b16 %v631
      %v675 = vunpack.c.h.b16 %v631
      %v676 = vunpack.c.l.b16 %v632
      %v677 = vunpack.c.h.b16 %v632
      %v678 = vunpack.c.l.b16 %v633
      %v679 = vunpack.c.h.b16 %v633
      %v680 = vunpack.c.l.b16 %v634
      %v681 = vunpack.c.h.b16 %v634
      %v682 = vunpack.c.l.b16 %v635
      %v683 = vunpack.c.h.b16 %v635
      %v684 = vpack.c.b16 %v652, %v652
      %v685 = vpack.c.b16 %v653, %v653
      %v686 = vpack.c.b16 %v654, %v654
      %v687 = vpack.c.b16 %v655, %v655
      %v688 = vpack.c.b16 %v656, %v656
      %v689 = vpack.c.b16 %v657, %v657
      %v690 = vpack.c.b16 %v658, %v658
      %v691 = vpack.c.b16 %v659, %v659
      %v692 = vpack.c.b16 %v660, %v660
      %v693 = vpack.c.b16 %v661, %v661
      %v694 = vpack.c.b16 %v662, %v662
      %v695 = vpack.c.b16 %v663, %v663
      %v696 = vpack.c.b16 %v664, %v664
      %v697 = vpack.c.b16 %v665, %v665
      %v698 = vpack.c.b16 %v666, %v666
      %v699 = vpack.c.b16 %v667, %v667
      %v700 = vpack.c.b16 %v668, %v668
      %v701 = vpack.c.b16 %v669, %v669
      %v702 = vpack.c.b16 %v670, %v670
      %v703 = vpack.c.b16 %v671, %v671
      %v704 = vpack.c.b16 %v672, %v672
      %v705 = vpack.c.b16 %v673, %v673
      %v706 = vpack.c.b16 %v674, %v674
      %v707 = vpack.c.b16 %v675, %v675
      %v708 = vpack.c.b16 %v676, %v676
      %v709 = vpack.c.b16 %v677, %v677
      %v710 = vpack.c.b16 %v678, %v678
      %v711 = vpack.c.b16 %v679, %v679
      %v712 = vpack.c.b16 %v680, %v680
      %v713 = vpack.c.b16 %v681, %v681
      %v714 = vpack.c.b16 %v682, %v682
      %v715 = vpack.c.b16 %v683, %v683
      %vm748 = vcmask 125952
      %749 = vst.msk [vmem:[%s148] sm:$0xf] %vm748, %v684
      %750 = vst.msk [vmem:[%s148 + $0x4] sm:$0xf] %vm748, %v685
      %751 = vst.msk [vmem:[%s148 + $0x8] sm:$0xf] %vm748, %v686
      %752 = vst.msk [vmem:[%s148 + $0xc] sm:$0xf] %vm748, %v687
      %753 = vst.msk [vmem:[%s148 + $0x10] sm:$0xf] %vm748, %v688
      %754 = vst.msk [vmem:[%s148 + $0x14] sm:$0xf] %vm748, %v689
      %755 = vst.msk [vmem:[%s148 + $0x18] sm:$0xf] %vm748, %v690
      %756 = vst.msk [vmem:[%s148 + $0x1c] sm:$0xf] %vm748, %v691
      %757 = vst.msk [vmem:[%s148 + $0x20] sm:$0xf] %vm748, %v692
      %758 = vst.msk [vmem:[%s148 + $0x24] sm:$0xf] %vm748, %v693
      %759 = vst.msk [vmem:[%s148 + $0x28] sm:$0xf] %vm748, %v694
      %760 = vst.msk [vmem:[%s148 + $0x2c] sm:$0xf] %vm748, %v695
      %761 = vst.msk [vmem:[%s148 + $0x30] sm:$0xf] %vm748, %v696
      %762 = vst.msk [vmem:[%s148 + $0x34] sm:$0xf] %vm748, %v697
      %763 = vst.msk [vmem:[%s148 + $0x38] sm:$0xf] %vm748, %v698
      %764 = vst.msk [vmem:[%s148 + $0x3c] sm:$0xf] %vm748, %v699
      %765 = vst.msk [vmem:[%s148 + $0x40] sm:$0xf] %vm748, %v700
      %766 = vst.msk [vmem:[%s148 + $0x44] sm:$0xf] %vm748, %v701
      %767 = vst.msk [vmem:[%s148 + $0x48] sm:$0xf] %vm748, %v702
      %768 = vst.msk [vmem:[%s148 + $0x4c] sm:$0xf] %vm748, %v703
      %769 = vst.msk [vmem:[%s148 + $0x50] sm:$0xf] %vm748, %v704
      %770 = vst.msk [vmem:[%s148 + $0x54] sm:$0xf] %vm748, %v705
      %771 = vst.msk [vmem:[%s148 + $0x58] sm:$0xf] %vm748, %v706
      %772 = vst.msk [vmem:[%s148 + $0x5c] sm:$0xf] %vm748, %v707
      %773 = vst.msk [vmem:[%s148 + $0x60] sm:$0xf] %vm748, %v708
      %774 = vst.msk [vmem:[%s148 + $0x64] sm:$0xf] %vm748, %v709
      %775 = vst.msk [vmem:[%s148 + $0x68] sm:$0xf] %vm748, %v710
      %776 = vst.msk [vmem:[%s148 + $0x6c] sm:$0xf] %vm748, %v711
      %777 = vst.msk [vmem:[%s148 + $0x70] sm:$0xf] %vm748, %v712
      %778 = vst.msk [vmem:[%s148 + $0x74] sm:$0xf] %vm748, %v713
      %779 = vst.msk [vmem:[%s148 + $0x78] sm:$0xf] %vm748, %v714
      %780 = vst.msk [vmem:[%s148 + $0x7c] sm:$0xf] %vm748, %v715
      %s781 = smul.u32 32, %s13
      %p782 = scmp.lt.s32.totalorder %s781, 63
      %s783 = scalar_select %p782, %s781, 63
      %s784 = smul.addr %s783, 4
      %s785 = scalar_lea.vmem %s2, %s784
      // Predicated region
      $region29: #{tpu_custom_call.1} parent=27 // pred_check
        %p786 = pneg %p78
      $region30: #{tpu_custom_call.1} parent=27 // pred_check_branch
        %788 = sbr.rel (%p786) target = $region32
      $region31: #{tpu_custom_call.1} parent=27 // pred_region
        %s789 = smul.u32 32, %s13
      $region32: #{tpu_custom_call.1} parent=27 // pred_fallthru
        _
    $region28: #{tpu_custom_call.1} parent=5 // pred_fallthru
      _
    %p790 = scmp.le.s32.totalorder 2, %s8
    // Predicated region
    $region33: #{tpu_custom_call.1} parent=5 // pred_check
      %p791 = pneg %p790
    $region34: #{tpu_custom_call.1} parent=5 // pred_check_branch
      %793 = sbr.rel (%p791) target = $region36
    $region35: #{tpu_custom_call.1} parent=5 // pred_region
      %s794 = ssub.s32 %s8, 2
      // Predicated region
      $region37: #{tpu_custom_call.1} parent=35 // pred_check
        %p795 = pneg %p84
      $region38: #{tpu_custom_call.1} parent=35 // pred_check_branch
        %797 = sbr.rel (%p795) target = $region40
      $region39: #{tpu_custom_call.1} parent=35 // pred_region
        %s798 = smul.u32 32, %s14
        %p799 = scmp.lt.s32.totalorder %s798, 63
        %s800 = scalar_select %p799, %s798, 63
        %s801 = smul.addr %s800, 4
        %s802 = scalar_lea.vmem %s2, %s801
      $region40: #{tpu_custom_call.1} parent=35 // pred_fallthru
        _
    $region36: #{tpu_custom_call.1} parent=5 // pred_fallthru
      _
  $region6: #{tpu_custom_call.1} parent=0 // loop_footer
    %s12 = sadd.s32 1, %s8
  $region7: #{tpu_custom_call.1} parent=0 // loop_footer_branch
    %7 = sbr.rel target = $region3
  $region8: #{tpu_custom_call.1} parent=0 // loop_exit
    _

</llo_original>
